<compile_context>
chip_gen: v5e
topology: v5e:2x2
jax: 0.10.0
libtpu: 0.0.40
codegen_flags: <defaults>
</compile_context>

<pallas_src>
import functools

import jax
import jax.numpy as jnp
from jax.experimental import pallas as pl
from jax.experimental.pallas import tpu as pltpu


def _round_up(x, m):
    return (x + m - 1) // m * m


def _pick_tile_m(M, cap=256):
    """Sublane tile for the GEMM M dim: multiple of 8 that divides M, or full."""
    if M <= cap:
        return M, M
    for t in range(cap, 7, -8):
        if M % t == 0:
            return t, M
    return cap, _round_up(M, cap)          # rare fallback: pad


def _pick_tile_n(N):
    """Lane tile for the GEMM N dim: multiple of 128 that divides N, or full."""
    cap = 512 if N >= 512 else 256
    if N <= cap:
        return N, N
    for t in range(cap, 127, -128):
        if N % t == 0:
            return t, N
    return 256, _round_up(N, 256)          # rare fallback: pad


def _pick_tile_k(K, cap=2304):
    """K tile: keep whole K when it fits comfortably, else a 128-multiple divisor."""
    if K <= cap:
        return K, K
    for t in range(cap, 127, -128):
        if K % t == 0:
            return t, K
    return 2048, _round_up(K, 2048)        # rare fallback: pad


def _ensure_two_parallel(tm, tn, Mp, Np):
    """v7x has 2 TensorCores: make sure the parallel grid has >= 2 programs."""
    if (Mp // tm) * (Np // tn) >= 2:
        return tm, tn
    if tm % 16 == 0:                       # halved tile stays a multiple of 8
        return tm // 2, tn
    if tn % 256 == 0:                      # halved tile stays a multiple of 128
        return tm, tn // 2
    return tm, tn


# --------------------------------------------------------------------------
# Fused GEMM kernels: out = [relu](A @ B + bias [+ residual])
# --------------------------------------------------------------------------
def _make_matmul_kernel(relu, has_res, multi_k):
    if multi_k:
        def kernel(*refs):
            if has_res:
                a_ref, b_ref, bias_ref, res_ref, o_ref, acc_ref = refs
            else:
                a_ref, b_ref, bias_ref, o_ref, acc_ref = refs
                res_ref = None

            @pl.when(pl.program_id(2) == 0)
            def _():
                acc_ref[...] = jnp.zeros_like(acc_ref)

            acc_ref[...] += jnp.dot(a_ref[...], b_ref[...],
                                    preferred_element_type=jnp.float32)

            @pl.when(pl.program_id(2) == pl.num_programs(2) - 1)
            def _():
                r = acc_ref[...] + bias_ref[...]
                if has_res:
                    r = r + res_ref[...].astype(jnp.float32)
                if relu:
                    r = jnp.maximum(r, 0.0)
                o_ref[...] = r.astype(o_ref.dtype)

        return kernel

    # Single K step: no VMEM scratch accumulator, no zero-init, no extra RMW.
    def kernel(*refs):
        if has_res:
            a_ref, b_ref, bias_ref, res_ref, o_ref = refs
        else:
            a_ref, b_ref, bias_ref, o_ref = refs
            res_ref = None
        r = jnp.dot(a_ref[...], b_ref[...], preferred_element_type=jnp.float32)
        r = r + bias_ref[...]
        if has_res:
            r = r + res_ref[...].astype(jnp.float32)
        if relu:
            r = jnp.maximum(r, 0.0)
        o_ref[...] = r.astype(o_ref.dtype)

    return kernel


def matmul_bias(a, b, bias, relu=False, res=None, out_dtype=None):
    """out = [relu](a @ b + bias [+ res]).  a:(M,K) b:(K,N) bias:(N,) res:(M,N)."""
    M, K = a.shape
    K2, N = b.shape
    assert K == K2
    out_dtype = out_dtype if out_dtype is not None else a.dtype

    tm, Mp = _pick_tile_m(M)
    tn, Np = _pick_tile_n(N)
    tk, Kp = _pick_tile_k(K)
    tm, tn = _ensure_two_parallel(tm, tn, Mp, Np)

    if Mp != M or Kp != K:
        a = jnp.pad(a, ((0, Mp - M), (0, Kp - K)))
    if Kp != K or Np != N:
        b = jnp.pad(b, ((0, Kp - K), (0, Np - N)))
    bias2 = bias.reshape(1, N)
    if Np != N:
        bias2 = jnp.pad(bias2, ((0, 0), (0, Np - N)))

    has_res = res is not None
    if has_res and (Mp != M or Np != N):
        res = jnp.pad(res, ((0, Mp - M), (0, Np - N)))

    multi_k = (Kp // tk) > 1
    inputs = [a, b, bias2]

    if multi_k:
        in_specs = [
            pl.BlockSpec((tm, tk), lambda i, j, k: (i, k)),
            pl.BlockSpec((tk, tn), lambda i, j, k: (k, j)),
            pl.BlockSpec((1, tn), lambda i, j, k: (0, j)),
        ]
        if has_res:
            inputs.append(res)
            in_specs.append(pl.BlockSpec((tm, tn), lambda i, j, k: (i, j)))
        out = pl.pallas_call(
            _make_matmul_kernel(relu, has_res, True),
            out_shape=jax.ShapeDtypeStruct((Mp, Np), out_dtype),
            grid=(Mp // tm, Np // tn, Kp // tk),
            in_specs=in_specs,
            out_specs=pl.BlockSpec((tm, tn), lambda i, j, k: (i, j)),
            scratch_shapes=[pltpu.VMEM((tm, tn), jnp.float32)],
            compiler_params=pltpu.CompilerParams(
                dimension_semantics=("parallel", "parallel", "arbitrary"),
                vmem_limit_bytes=32 * 1024 * 1024),
        )(*inputs)
    else:
        in_specs = [
            pl.BlockSpec((tm, tk), lambda i, j: (i, 0)),
            pl.BlockSpec((tk, tn), lambda i, j: (0, j)),
            pl.BlockSpec((1, tn), lambda i, j: (0, j)),
        ]
        if has_res:
            inputs.append(res)
            in_specs.append(pl.BlockSpec((tm, tn), lambda i, j: (i, j)))
        out = pl.pallas_call(
            _make_matmul_kernel(relu, has_res, False),
            out_shape=jax.ShapeDtypeStruct((Mp, Np), out_dtype),
            grid=(Mp // tm, Np // tn),
            in_specs=in_specs,
            out_specs=pl.BlockSpec((tm, tn), lambda i, j: (i, j)),
            compiler_params=pltpu.CompilerParams(
                dimension_semantics=("parallel", "parallel"),
                vmem_limit_bytes=32 * 1024 * 1024),
        )(*inputs)

    if Mp != M or Np != N:
        out = out[:M, :N]
    return out


# --------------------------------------------------------------------------
# Stride-1 3x3 conv: whole padded image per grid step, merged (H*W, Cin) LHS,
# Cout-major grid keeps the (large) weight tile resident across images.
# --------------------------------------------------------------------------
def _conv3x3s1_kernel(a_ref, w_ref, bias_ref, o_ref, *, H, W, relu):
    # a_ref: (1, H+2, W+2, Cin)  w_ref: (3, 3, Cin, tn)  bias: (1, tn)
    # o_ref: (1, H*W, tn)
    Cin = a_ref.shape[3]
    tn = o_ref.shape[2]
    acc = jnp.zeros((H * W, tn), jnp.float32)
    for kh in range(3):
        for kw in range(3):
            a = a_ref[0, kh:kh + H, kw:kw + W, :].reshape(H * W, Cin)
            acc = acc + jnp.dot(a, w_ref[kh, kw],
                                preferred_element_type=jnp.float32)
    r = acc + bias_ref[...]
    if relu:
        r = jnp.maximum(r, 0.0)
    o_ref[0] = r.astype(o_ref.dtype)


def conv3x3_s1_bn_act(x, w, bias, relu=True):
    """3x3, stride 1, pad 1 conv with folded BN (+ReLU).  x: NHWC bf16."""
    N, H, W, Cin = x.shape
    Cout = w.shape[3]
    xpad = jnp.pad(x, ((0, 0), (1, 1), (1, 1), (0, 0)))

    # Cout tile: Cout in {64,128,256,512}; cap at 256 so the weight tile stays
    # modest.  Split further only if the parallel grid would be a single block.
    tn = Cout if Cout <= 256 else 256
    if N * (Cout // tn) < 2 and tn >= 256:
        tn //= 2

    out = pl.pallas_call(
        functools.partial(_conv3x3s1_kernel, H=H, W=W, relu=relu),
        out_shape=jax.ShapeDtypeStruct((N, H * W, Cout), x.dtype),
        grid=(Cout // tn, N),            # Cout outer, N inner -> weights resident
        in_specs=[
            pl.BlockSpec((1, H + 2, W + 2, Cin), lambda j, n: (n, 0, 0, 0)),
            pl.BlockSpec((3, 3, Cin, tn), lambda j, n: (0, 0, 0, j)),
            pl.BlockSpec((1, tn), lambda j, n: (0, j)),
        ],
        out_specs=pl.BlockSpec((1, H * W, tn), lambda j, n: (n, 0, j)),
        compiler_params=pltpu.CompilerParams(
            dimension_semantics=("parallel", "parallel"),
            vmem_limit_bytes=32 * 1024 * 1024),
    )(xpad, w, bias.reshape(1, Cout))
    return out.reshape(N, H, W, Cout)


# --------------------------------------------------------------------------
# 3x3 stride-2 max pool (phase-split so all 9 taps are unit-stride in-kernel)
# --------------------------------------------------------------------------
def _maxpool_kernel(x_ref, o_ref):
    # x_ref: (1, 4, Ho+1, Wo+1, C) phases [row parity * 2 + col parity]
    Ho, Wo = o_ref.shape[1], o_ref.shape[2]
    m = None
    for i in range(3):
        for j in range(3):
            p = (i % 2) * 2 + (j % 2)
            ai, aj = i // 2, j // 2
            t = x_ref[0, p, ai:ai + Ho, aj:aj + Wo, :]
            m = t if m is None else jnp.maximum(m, t)
    o_ref[0] = m.astype(o_ref.dtype)


def maxpool2d_3x3_s2(x):
    """3x3 max-pool, stride 2, padding 1 on NHWC input."""
    N, H, W, C = x.shape
    Ho = (H + 2 - 3) // 2 + 1
    Wo = (W + 2 - 3) // 2 + 1
    Hp, Wp = 2 * Ho + 2, 2 * Wo + 2
    neg = float(jnp.finfo(x.dtype).min)
    xp = jnp.pad(x, ((0, 0), (1, Hp - H - 1), (1, Wp - W - 1), (0, 0)),
                 constant_values=neg)
    # even/odd split of rows and columns -> all taps become unit-stride slices
    xph = xp.reshape(N, Ho + 1, 2, Wo + 1, 2, C)
    xph = jnp.transpose(xph, (0, 2, 4, 1, 3, 5)).reshape(N, 4, Ho + 1, Wo + 1, C)
    return pl.pallas_call(
        _maxpool_kernel,
        out_shape=jax.ShapeDtypeStruct((N, Ho, Wo, C), x.dtype),
        grid=(N,),
        in_specs=[pl.BlockSpec((1, 4, Ho + 1, Wo + 1, C),
                               lambda n: (n, 0, 0, 0, 0))],
        out_specs=pl.BlockSpec((1, Ho, Wo, C), lambda n: (n, 0, 0, 0)),
        compiler_params=pltpu.CompilerParams(dimension_semantics=("parallel",)),
    )(xph)


# --------------------------------------------------------------------------
# Global average pool (in-kernel f32 reduction over H*W)
# --------------------------------------------------------------------------
def _avgpool_kernel(x_ref, o_ref, *, inv_hw):
    s = jnp.sum(x_ref[0].astype(jnp.float32), axis=0, keepdims=True)
    o_ref[...] = (s * inv_hw).astype(o_ref.dtype)


def global_avg_pool(x, out_dtype=jnp.float32):
    """F.avg_pool2d(x, x.size()[2:]) + flatten -> (N, C)."""
    N, H, W, C = x.shape
    hw = H * W
    xr = x.reshape(N, hw, C)
    return pl.pallas_call(
        functools.partial(_avgpool_kernel, inv_hw=1.0 / hw),
        out_shape=jax.ShapeDtypeStruct((N, C), out_dtype),
        grid=(N,),
        in_specs=[pl.BlockSpec((1, hw, C), lambda n: (n, 0, 0))],
        out_specs=pl.BlockSpec((1, C), lambda n: (n, 0)),
        compiler_params=pltpu.CompilerParams(dimension_semantics=("parallel",)),
    )(xr)


# --------------------------------------------------------------------------
# Conv dispatcher
# --------------------------------------------------------------------------
def conv2d_bn_act(x, p, stride, padding, relu, res=None):
    """Conv2d with BN folded into (w, bias); optional fused residual + ReLU."""
    w, bias = p["w"], p["b"]
    KH, KW, Cin, Cout = w.shape
    N = x.shape[0]

    if KH == 3 and KW == 3 and stride == 1 and res is None:
        return conv3x3_s1_bn_act(x, w, bias, relu=relu)

    if padding > 0:
        x = jnp.pad(x, ((0, 0), (padding, padding), (padding, padding), (0, 0)))
    Hp, Wp = x.shape[1], x.shape[2]
    Ho = (Hp - KH) // stride + 1
    Wo = (Wp - KW) // stride + 1

    if KH == 1 and KW == 1:
        patches = x[:, ::stride, ::stride, :][:, :Ho, :Wo, :]
        a = patches.reshape(N * Ho * Wo, Cin)
    else:
        # materialized im2col only for the 7x7 stem and the 3 stride-2 3x3 convs
        cols = []
        for i in range(KH):
            for j in range(KW):
                pch = x[:, i:i + stride * Ho:stride, j:j + stride * Wo:stride, :]
                cols.append(pch[:, :Ho, :Wo, :])
        a = jnp.concatenate(cols, axis=-1).reshape(N * Ho * Wo, KH * KW * Cin)

    res2 = None if res is None else res.reshape(N * Ho * Wo, Cout)
    out = matmul_bias(a, w.reshape(KH * KW * Cin, Cout), bias, relu=relu, res=res2)
    return out.reshape(N, Ho, Wo, Cout)


# --------------------------------------------------------------------------
# Parameter init (deterministic, synthetic; BN folded into conv weight/bias)
# --------------------------------------------------------------------------
def init_conv_bn(key, kh, kw, cin, cout):
    kw_key, g_key, b_key, m_key, v_key = jax.random.split(key, 5)
    fan_in = kh * kw * cin
    w = jax.random.normal(kw_key, (kh, kw, cin, cout), jnp.float32) * jnp.sqrt(2.0 / fan_in)
    gamma = 1.0 + 0.1 * jax.random.normal(g_key, (cout,), jnp.float32)
    beta = 0.1 * jax.random.normal(b_key, (cout,), jnp.float32)
    mean = 0.1 * jax.random.normal(m_key, (cout,), jnp.float32)
    var = 1.0 + 0.1 * jax.random.uniform(v_key, (cout,), jnp.float32)
    scale = gamma / jnp.sqrt(var + 1e-5)
    return {"w": (w * scale[None, None, None, :]).astype(jnp.bfloat16),
            "b": (beta - mean * scale).astype(jnp.float32)}


def init_resnet50_params(key, num_classes):
    params = {}
    key, k = jax.random.split(key)
    params["conv1"] = init_conv_bn(k, 7, 7, 3, 64)

    layers_cfg = [(64, 3, 1), (128, 4, 2), (256, 6, 2), (512, 3, 2)]
    expansion = 4
    inplanes = 64
    all_layers = []
    for planes, nblocks, stride in layers_cfg:
        layer_blocks = []
        for bi in range(nblocks):
            key, k1, k2, k3, k4 = jax.random.split(key, 5)
            s = stride if bi == 0 else 1
            blk = {
                "conv1": init_conv_bn(k1, 1, 1, inplanes, planes),
                "conv2": init_conv_bn(k2, 3, 3, planes, planes),
                "conv3": init_conv_bn(k3, 1, 1, planes, planes * expansion),
                "stride": s,
            }
            if s != 1 or inplanes != planes * expansion:
                blk["downsample"] = init_conv_bn(k4, 1, 1, inplanes, planes * expansion)
            layer_blocks.append(blk)
            inplanes = planes * expansion
        all_layers.append(layer_blocks)
    params["layers"] = all_layers

    key, kf = jax.random.split(key)
    params["fc"] = {
        "w": (jax.random.normal(kf, (2048, num_classes), jnp.float32)
              / jnp.sqrt(2048.0)).astype(jnp.bfloat16),
        "b": jnp.zeros((num_classes,), jnp.float32),
    }
    return params


# --------------------------------------------------------------------------
# Forward pass
# --------------------------------------------------------------------------
def bottleneck_forward(x, blk):
    s = blk["stride"]
    out = conv2d_bn_act(x, blk["conv1"], 1, 0, relu=True)
    out = conv2d_bn_act(out, blk["conv2"], s, 1, relu=True)
    if "downsample" in blk:
        identity = conv2d_bn_act(x, blk["downsample"], s, 0, relu=False)
    else:
        identity = x
    # conv3 with residual add + ReLU fused into the GEMM epilogue
    return conv2d_bn_act(out, blk["conv3"], 1, 0, relu=True, res=identity)


def resnet50_forward(x_nchw, params, training=True):
    """Matches ResNet50.forward with loss={'xent'}: eval -> f, train -> y."""
    x = jnp.transpose(x_nchw, (0, 2, 3, 1)).astype(jnp.bfloat16)  # NCHW -> NHWC bf16
    x = conv2d_bn_act(x, params["conv1"], 2, 3, relu=True)
    x = maxpool2d_3x3_s2(x)
    for layer_blocks in params["layers"]:
        for blk in layer_blocks:
            x = bottleneck_forward(x, blk)
    f = global_avg_pool(x, out_dtype=jnp.float32)   # == avg_pool2d + view(N, -1)
    if not training:
        return f
    y = matmul_bias(f.astype(jnp.bfloat16), params["fc"]["w"], params["fc"]["b"],
                    relu=False, out_dtype=jnp.float32)
    return y


# --------------------------------------------------------------------------
if __name__ == "__main__":
    num_classes = 10
    key = jax.random.PRNGKey(0)
    pkey, xkey = jax.random.split(key)

    params = init_resnet50_params(pkey, num_classes)
    # Small but valid input: total downsampling factor is 32 -> 32x32 image.
    x = jax.random.normal(xkey, (2, 3, 32, 32), jnp.float32)  # NCHW like PyTorch

    # Training-mode forward (loss={'xent'}): returns class logits y.
    y = resnet50_forward(x, params, training=True)
    y = jax.block_until_ready(y)
    assert y.shape == (2, num_classes), y.shape

    # Eval-mode forward: returns the 2048-d pooled feature f.
    f = resnet50_forward(x, params, training=False)
    f = jax.block_until_ready(f)
    assert f.shape == (2, 2048), f.shape

    print("KERNEL_OK")
</pallas_src>

<mosaic_0001>
module attributes {stable_mosaic.version = 11 : i64} {
  func.func @kernel(%arg0: i32, %arg1: i32, %arg2: memref<256x147xbf16, #tpu.memory_space<vmem>>, %arg3: memref<147x64xbf16, #tpu.memory_space<vmem>>, %arg4: memref<1x64xf32, #tpu.memory_space<vmem>>, %arg5: memref<256x64xbf16, #tpu.memory_space<vmem>>) attributes {dimension_semantics = [#tpu.dimension_semantics<parallel>, #tpu.dimension_semantics<parallel>], iteration_bounds = array<i64: 2, 1>, scalar_prefetch = 0 : i64, scratch_operands = 0 : i64, tpu.core_type = #tpu.core_type<tc>, window_params = [{transform_indices = @transform_0, window_bounds = array<i64: 256, 147>}, {transform_indices = @transform_1, window_bounds = array<i64: 147, 64>}, {transform_indices = @transform_2, window_bounds = array<i64: 1, 64>}, {transform_indices = @transform_3, window_bounds = array<i64: 256, 64>}]} {
    %c0 = arith.constant 0 : index
    %c0_0 = arith.constant 0 : index
    %0 = vector.load %arg2[%c0, %c0_0] : memref<256x147xbf16, #tpu.memory_space<vmem>>, vector<256x147xbf16>
    %c0_1 = arith.constant 0 : index
    %c0_2 = arith.constant 0 : index
    %1 = vector.load %arg3[%c0_1, %c0_2] : memref<147x64xbf16, #tpu.memory_space<vmem>>, vector<147x64xbf16>
    %cst = arith.constant dense<0.000000e+00> : vector<256x64xf32>
    %2 = tpu.matmul %0, %1, %cst {dimension_numbers = #tpu.dot_dimension_numbers<[1], [0], [0], [1], [0, 0, 1, 1], [], []>} : vector<256x147xbf16>, vector<147x64xbf16>, vector<256x64xf32> -> vector<256x64xf32>
    %c0_3 = arith.constant 0 : index
    %c0_4 = arith.constant 0 : index
    %3 = vector.load %arg4[%c0_3, %c0_4] : memref<1x64xf32, #tpu.memory_space<vmem>>, vector<1x64xf32>
    %4 = vector.broadcast %3 : vector<1x64xf32> to vector<256x64xf32>
    %5 = arith.addf %2, %4 : vector<256x64xf32>
    %cst_5 = arith.constant 0.000000e+00 : f32
    %6 = vector.broadcast %cst_5 : f32 to vector<256x64xf32>
    %7 = arith.maximumf %5, %6 : vector<256x64xf32>
    %8 = arith.truncf %7 : vector<256x64xf32> to vector<256x64xbf16>
    %c0_6 = arith.constant 0 : index
    %c0_7 = arith.constant 0 : index
    %9 = vector.load %arg5[%c0_6, %c0_7] : memref<256x64xbf16, #tpu.memory_space<vmem>>, vector<256x64xbf16>
    tpu.vector_store %arg5[%c0_6, %c0_7], %8 {strides = array<i32>} : memref<256x64xbf16, #tpu.memory_space<vmem>>, vector<256x64xbf16>,
    return
  }
  func.func @transform_0(%arg0: i32, %arg1: i32) -> (i32, i32) {
    %c0_i32 = arith.constant 0 : i32
    %c0_i32_0 = arith.constant 0 : i32
    return %arg0, %c0_i32 : i32, i32
  }
  func.func @transform_1(%arg0: i32, %arg1: i32) -> (i32, i32) {
    %c0_i32 = arith.constant 0 : i32
    %c0_i32_0 = arith.constant 0 : i32
    return %c0_i32, %arg1 : i32, i32
  }
  func.func @transform_2(%arg0: i32, %arg1: i32) -> (i32, i32) {
    %c0_i32 = arith.constant 0 : i32
    %c0_i32_0 = arith.constant 0 : i32
    return %c0_i32, %arg1 : i32, i32
  }
  func.func @transform_3(%arg0: i32, %arg1: i32) -> (i32, i32) {
    %c0_i32 = arith.constant 0 : i32
    return %arg0, %arg1 : i32, i32
  }
}

</mosaic_0001>

<llo_original>
// kernel: tpu_custom_call.1
$region0: #{tpu_custom_call.1}
  #allocation0 [shape = 'u32[]', space=smem, size = 0x4, offset = 0x4, fixed_abs, tag = 'smem constant byte address 0x4 - core index']
  #allocation1 [shape = 'u32[72,128]{1,0:T(1,128)}', space=vmem, size = 0x9000, scoped, tag = 'internal scratch']
  %s0 = inlined_call_operand.vmem [shape: bf16[512,147], index: 0, kind: input, shape index: {}]
  %s1 = inlined_call_operand.vmem [shape: bf16[147,64], index: 1, kind: input, shape index: {}]
  %s2 = inlined_call_operand.vmem [shape: f32[1,64], index: 2, kind: input, shape index: {}]
  %s3 = inlined_call_operand.vmem [shape: bf16[512,64], index: 3, kind: output, shape index: {}]
  %s4 = sld [smem:[#allocation0]]
  $region45: #{tpu_custom_call.1} parent=0
    _
  %s6 = ssub.s32 1, %s4
  %s7 = scalar_select 0, %s6, %s4
  loop: start=0, step=1, limit=4
  $region2: #{tpu_custom_call.1} parent=0 // loop_pre_header
    _
  $region3: #{tpu_custom_call.1} parent=0 // loop_header
    %s9 = sphi 0, %s13
    %p10 = scmp.ge.s32.totalorder %s9, 4
    %s16 = sphi 0, %s28
    %s17 = sphi 0, %s24
    %s18 = sphi 0, %s16
    %s19 = sphi 0, %s17
    %s20 = sphi 0, %s18
    %s21 = sphi 0, %s19
    %s31 = sphi 0, %s33
    %s34 = sphi 0, %s31
    %s35 = sphi 0, %s34
    %s51 = sphi 0, %s35
    %s57 = sphi 0, %s59
    %s60 = sphi 0, %s57
    %s61 = sphi 0, %s60
    %s77 = sphi 0, %s61
    %s83 = sphi 0, %s85
    %s86 = sphi 0, %s83
    %s87 = sphi 0, %s86
    %s103 = sphi 0, %s87
    %s111 = sphi 0, %s113
    %s114 = sphi 0, %s111
    %s115 = sphi 0, %s114
    %s131 = sphi 0, %s115
  $region4: #{tpu_custom_call.1} parent=0 // loop_header_branch
    %12 = sbr.rel (%p10) target = $region8
  $region5: #{tpu_custom_call.1} parent=0 // loop_body
    %s14 = ssub.s32 %s9, 1
    %s15 = ssub.s32 %s9, 2
    %s22 = sadd.s32 1, %s17
    %p23 = scmp.ge.s32.totalorder %s22, 1
    %s24 = scalar_select %p23, 0, %s22
    %s25 = sadd.s32 1, %s16
    %s26 = scalar_select %p23, %s25, %s16
    %p27 = scmp.ge.s32.totalorder %s26, 2
    %s28 = scalar_select %p27, 0, %s26
    %s29 = ssub.s32 %s16, %s28
    %p30 = scmp.eq.s32.totalorder %s29, 0
    %s32 = sadd.s32 %s31, 1
    %s33 = scalar_select %p30, %s31, %s32
    %p36 = pneg %p30
    %p37 = scmp.eq.s32.totalorder %s9, 1
    %p38 = por %p36, %p37
    %p39 = scmp.ne.s32.totalorder %s31, %s34
    %p40 = scmp.eq.s32.totalorder %s9, 0
    %p41 = por %p39, %p40
    %p42 = scmp.ne.s32.totalorder %s31, %s34
    %p43 = scmp.eq.s32.totalorder %s14, 1
    %p44 = por %p42, %p43
    %p45 = scmp.ne.s32.totalorder %s34, %s35
    %p46 = scmp.eq.s32.totalorder %s14, 0
    %p47 = por %p45, %p46
    %p48 = scmp.ne.s32.totalorder %s34, %s35
    %p49 = scmp.eq.s32.totalorder %s15, 1
    %p50 = por %p48, %p49
    %p52 = scmp.ne.s32.totalorder %s35, %s51
    %p53 = scmp.eq.s32.totalorder %s15, 0
    %p54 = por %p52, %p53
    %s55 = ssub.s32 %s17, %s24
    %p56 = scmp.eq.s32.totalorder %s55, 0
    %s58 = sadd.s32 %s57, 1
    %s59 = scalar_select %p56, %s57, %s58
    %p62 = pneg %p56
    %p63 = scmp.eq.s32.totalorder %s9, 1
    %p64 = por %p62, %p63
    %p65 = scmp.ne.s32.totalorder %s57, %s60
    %p66 = scmp.eq.s32.totalorder %s9, 0
    %p67 = por %p65, %p66
    %p68 = scmp.ne.s32.totalorder %s57, %s60
    %p69 = scmp.eq.s32.totalorder %s14, 1
    %p70 = por %p68, %p69
    %p71 = scmp.ne.s32.totalorder %s60, %s61
    %p72 = scmp.eq.s32.totalorder %s14, 0
    %p73 = por %p71, %p72
    %p74 = scmp.ne.s32.totalorder %s60, %s61
    %p75 = scmp.eq.s32.totalorder %s15, 1
    %p76 = por %p74, %p75
    %p78 = scmp.ne.s32.totalorder %s61, %s77
    %p79 = scmp.eq.s32.totalorder %s15, 0
    %p80 = por %p78, %p79
    %s81 = ssub.s32 %s17, %s24
    %p82 = scmp.eq.s32.totalorder %s81, 0
    %s84 = sadd.s32 %s83, 1
    %s85 = scalar_select %p82, %s83, %s84
    %p88 = pneg %p82
    %p89 = scmp.eq.s32.totalorder %s9, 1
    %p90 = por %p88, %p89
    %p91 = scmp.ne.s32.totalorder %s83, %s86
    %p92 = scmp.eq.s32.totalorder %s9, 0
    %p93 = por %p91, %p92
    %p94 = scmp.ne.s32.totalorder %s83, %s86
    %p95 = scmp.eq.s32.totalorder %s14, 1
    %p96 = por %p94, %p95
    %p97 = scmp.ne.s32.totalorder %s86, %s87
    %p98 = scmp.eq.s32.totalorder %s14, 0
    %p99 = por %p97, %p98
    %p100 = scmp.ne.s32.totalorder %s86, %s87
    %p101 = scmp.eq.s32.totalorder %s15, 1
    %p102 = por %p100, %p101
    %p104 = scmp.ne.s32.totalorder %s87, %s103
    %p105 = scmp.eq.s32.totalorder %s15, 0
    %p106 = por %p104, %p105
    %s107 = ssub.s32 %s16, %s28
    %s108 = ssub.s32 %s17, %s24
    %s109 = sor.u32 %s107, %s108
    %p110 = scmp.eq.s32.totalorder %s109, 0
    %s112 = sadd.s32 %s111, 1
    %s113 = scalar_select %p110, %s111, %s112
    %p116 = pneg %p110
    %p117 = scmp.eq.s32.totalorder %s9, 1
    %p118 = por %p116, %p117
    %p119 = scmp.ne.s32.totalorder %s111, %s114
    %p120 = scmp.eq.s32.totalorder %s9, 0
    %p121 = por %p119, %p120
    %p122 = scmp.ne.s32.totalorder %s111, %s114
    %p123 = scmp.eq.s32.totalorder %s14, 1
    %p124 = por %p122, %p123
    %p125 = scmp.ne.s32.totalorder %s114, %s115
    %p126 = scmp.eq.s32.totalorder %s14, 0
    %p127 = por %p125, %p126
    %p128 = scmp.ne.s32.totalorder %s114, %s115
    %p129 = scmp.eq.s32.totalorder %s15, 1
    %p130 = por %p128, %p129
    %p132 = scmp.ne.s32.totalorder %s115, %s131
    %p133 = scmp.eq.s32.totalorder %s15, 0
    %p134 = por %p132, %p133
    %p135 = scmp.le.s32.totalorder 1, %s9
    %p136 = scmp.lt.s32.totalorder %s9, 3
    %p137 = pnand %p135, %p136
    %p138 = pneg %p137
    // Predicated region
    $region9: #{tpu_custom_call.1} parent=5 // pred_check
      _
    $region10: #{tpu_custom_call.1} parent=5 // pred_check_branch
      %140 = sbr.rel (%p137) target = $region12
    $region11: #{tpu_custom_call.1} parent=5 // pred_region
      %s141 = ssub.s32 %s9, 1
      // Predicated region
      $region13: #{tpu_custom_call.1} parent=11 // pred_check
        %p142 = pneg %p73
      $region14: #{tpu_custom_call.1} parent=11 // pred_check_branch
        %144 = sbr.rel (%p142) target = $region16
      $region15: #{tpu_custom_call.1} parent=11 // pred_region
        %p145 = scmp.lt.s32.totalorder %s19, 0
        %s146 = scalar_select %p145, %s19, 0
        %s147 = smul.addr %s146, 4
        %s148 = scalar_lea.vmem %s1, %s147
      $region16: #{tpu_custom_call.1} parent=11 // pred_fallthru
        _
      // Predicated region
      $region17: #{tpu_custom_call.1} parent=11 // pred_check
        %p149 = pneg %p99
      $region18: #{tpu_custom_call.1} parent=11 // pred_check_branch
        %151 = sbr.rel (%p149) target = $region20
      $region19: #{tpu_custom_call.1} parent=11 // pred_region
        %p152 = scmp.lt.s32.totalorder %s19, 0
        %s153 = scalar_select %p152, %s19, 0
        %s154 = scalar_lea.vmem %s2, %s153
      $region20: #{tpu_custom_call.1} parent=11 // pred_fallthru
        _
    $region12: #{tpu_custom_call.1} parent=5 // pred_fallthru
      _
    %p155 = scmp.lt.s32.totalorder %s9, 2
    // Predicated region
    $region21: #{tpu_custom_call.1} parent=5 // pred_check
      %p156 = pneg %p155
    $region22: #{tpu_custom_call.1} parent=5 // pred_check_branch
      %158 = sbr.rel (%p156) target = $region24
    $region23: #{tpu_custom_call.1} parent=5 // pred_region
      // Predicated region
      $region25: #{tpu_custom_call.1} parent=23 // pred_check
        %p159 = pneg %p41
      $region26: #{tpu_custom_call.1} parent=23 // pred_check_branch
        %161 = sbr.rel (%p159) target = $region28
      $region27: #{tpu_custom_call.1} parent=23 // pred_region
        %s162 = smul.u32 32, %s16
        %p163 = scmp.lt.s32.totalorder %s162, 63
        %s164 = scalar_select %p163, %s162, 63
        %s165 = smul.addr %s164, 2
        %s166 = smul.addr %s165, 4
        %s167 = scalar_lea.vmem %s0, %s166
        %s168 = smul.u32 32, %s16
      $region28: #{tpu_custom_call.1} parent=23 // pred_fallthru
        _
    $region24: #{tpu_custom_call.1} parent=5 // pred_fallthru
      _
    %p169 = scmp.le.s32.totalorder 1, %s9
    %p170 = scmp.lt.s32.totalorder %s9, 3
    %p171 = pnand %p169, %p170
    %p172 = pneg %p171
    // Predicated region
    $region29: #{tpu_custom_call.1} parent=5 // pred_check
      _
    $region30: #{tpu_custom_call.1} parent=5 // pred_check_branch
      %174 = sbr.rel (%p171) target = $region32
    $region31: #{tpu_custom_call.1} parent=5 // pred_region
      %s175 = ssub.s32 %s9, 1
      %s176 = smul.u32 32, %s18
      %p177 = scmp.lt.s32.totalorder %s176, 63
      %s178 = scalar_select %p177, %s176, 63
      %s179 = smul.addr %s178, 2
      %s180 = smul.addr %s179, 4
      %s181 = scalar_lea.vmem %s0, %s180
      %p182 = pneg %p47
      %p183 = pneg %p44
      %p184 = scmp.lt.s32.totalorder %s19, 0
      %s185 = scalar_select %p184, %s19, 0
      %s186 = smul.addr %s185, 4
      %s187 = scalar_lea.vmem %s1, %s186
      %p188 = pneg %p73
      %p189 = pneg %p70
      %p190 = scmp.lt.s32.totalorder %s19, 0
      %s191 = scalar_select %p190, %s19, 0
      %s192 = scalar_lea.vmem %s2, %s191
      %p193 = pneg %p99
      %p194 = pneg %p96
      %p195 = pneg %p127
      %p196 = pneg %p124
      %s197 = smul.u32 32, %s18
      %p198 = scmp.lt.s32.totalorder %s197, 63
      %s199 = scalar_select %p198, %s197, 63
      %p200 = scmp.lt.s32.totalorder %s19, 0
      %s201 = scalar_select %p200, %s19, 0
      %s202 = sadd.s32 %s201, %s199
      %s203 = smul.addr %s202, 4
      %s204 = scalar_lea.vmem %s3, %s203
      %s205 = smul.u32 32, %s18
      %p206 = scmp.lt.s32.totalorder %s205, 63
      %s207 = scalar_select %p206, %s205, 63
      %s208 = smul.addr %s207, 2
      %s209 = smul.addr %s208, 4
      %s210 = scalar_lea.vmem %s0, %s209
      %s211 = smul.u32 32, %s18
      %p212 = scmp.lt.s32.totalorder %s19, 0
      %s213 = scalar_select %p212, %s19, 0
      %s214 = smul.addr %s213, 4
      %s215 = scalar_lea.vmem %s1, %s214
      %p216 = scmp.lt.s32.totalorder %s19, 0
      %s217 = scalar_select %p216, %s19, 0
      %s218 = scalar_lea.vmem %s2, %s217
      %s219 = smul.u32 32, %s18
      %p220 = scmp.lt.s32.totalorder %s219, 63
      %s221 = scalar_select %p220, %s219, 63
      %p222 = scmp.lt.s32.totalorder %s19, 0
      %s223 = scalar_select %p222, %s19, 0
      %s224 = sadd.s32 %s223, %s221
      %s225 = smul.addr %s224, 4
      %s226 = scalar_lea.vmem %s3, %s225
      %s227 = smul.u32 32, %s18
      %v229 = vld [vmem:[%s210] sm:$0xff]
      %v230 = vld [vmem:[%s210 + $0x8] sm:$0xff]
      %v231 = vld [vmem:[%s210 + $0x10] sm:$0xff]
      %v232 = vld [vmem:[%s210 + $0x18] sm:$0xff]
      %v233 = vld [vmem:[%s210 + $0x20] sm:$0xff]
      %v234 = vld [vmem:[%s210 + $0x28] sm:$0xff]
      %v235 = vld [vmem:[%s210 + $0x30] sm:$0xff]
      %v236 = vld [vmem:[%s210 + $0x38] sm:$0xff]
      %v237 = vld [vmem:[%s210 + $0x40] sm:$0xff]
      %v238 = vld [vmem:[%s210 + $0x48] sm:$0xff]
      %v239 = vld [vmem:[%s210 + $0x50] sm:$0xff]
      %v240 = vld [vmem:[%s210 + $0x58] sm:$0xff]
      %v241 = vld [vmem:[%s210 + $0x60] sm:$0xff]
      %v242 = vld [vmem:[%s210 + $0x68] sm:$0xff]
      %v243 = vld [vmem:[%s210 + $0x70] sm:$0xff]
      %v244 = vld [vmem:[%s210 + $0x78] sm:$0xff]
      %v245 = vld [vmem:[%s210 + $0x80] sm:$0xff]
      %v246 = vld [vmem:[%s210 + $0x88] sm:$0xff]
      %v247 = vld [vmem:[%s210 + $0x90] sm:$0xff]
      %v248 = vld [vmem:[%s210 + $0x98] sm:$0xff]
      %v249 = vld [vmem:[%s210 + $0xa0] sm:$0xff]
      %v250 = vld [vmem:[%s210 + $0xa8] sm:$0xff]
      %v251 = vld [vmem:[%s210 + $0xb0] sm:$0xff]
      %v252 = vld [vmem:[%s210 + $0xb8] sm:$0xff]
      %v253 = vld [vmem:[%s210 + $0xc0] sm:$0xff]
      %v254 = vld [vmem:[%s210 + $0xc8] sm:$0xff]
      %v255 = vld [vmem:[%s210 + $0xd0] sm:$0xff]
      %v256 = vld [vmem:[%s210 + $0xd8] sm:$0xff]
      %v257 = vld [vmem:[%s210 + $0xe0] sm:$0xff]
      %v258 = vld [vmem:[%s210 + $0xe8] sm:$0xff]
      %v259 = vld [vmem:[%s210 + $0xf0] sm:$0xff]
      %v260 = vld [vmem:[%s210 + $0xf8] sm:$0xff]
      %v261 = vld [vmem:[%s215] sm:$0xf]
      %v262 = vld [vmem:[%s215 + $0x4] sm:$0xf]
      %v263 = vld [vmem:[%s215 + $0x8] sm:$0xf]
      %v264 = vld [vmem:[%s215 + $0xc] sm:$0xf]
      %v265 = vld [vmem:[%s215 + $0x10] sm:$0xf]
      %v266 = vld [vmem:[%s215 + $0x14] sm:$0xf]
      %v267 = vld [vmem:[%s215 + $0x18] sm:$0xf]
      %v268 = vld [vmem:[%s215 + $0x1c] sm:$0xf]
      %v269 = vld [vmem:[%s215 + $0x20] sm:$0xf]
      %v270 = vld [vmem:[%s215 + $0x24] sm:$0xf]
      %v271 = vld [vmem:[%s215 + $0x28] sm:$0xf]
      %v272 = vld [vmem:[%s215 + $0x2c] sm:$0xf]
      %v273 = vld [vmem:[%s215 + $0x30] sm:$0xf]
      %v274 = vld [vmem:[%s215 + $0x34] sm:$0xf]
      %v275 = vld [vmem:[%s215 + $0x38] sm:$0xf]
      %v276 = vld [vmem:[%s215 + $0x3c] sm:$0xf]
      %v277 = vld [vmem:[%s215 + $0x40] sm:$0xf]
      %v278 = vld [vmem:[%s215 + $0x44] sm:$0xf]
      %v279 = vld [vmem:[%s215 + $0x48] sm:$0x3]
      %v280 = vld [vmem:[%s218] sm:$0x1]
      %v282 = vperm.slane %v280, 0
      %v316 = vunpack.c.l.b16 %v229
      %v317 = vunpack.c.h.b16 %v229
      %v318 = vunpack.c.l.b16 %v230
      %v319 = vunpack.c.h.b16 %v230
      %v320 = vunpack.c.l.b16 %v231
      %v321 = vunpack.c.h.b16 %v231
      %v322 = vunpack.c.l.b16 %v232
      %v323 = vunpack.c.h.b16 %v232
      %v324 = vunpack.c.l.b16 %v233
      %v325 = vunpack.c.h.b16 %v233
      %v326 = vunpack.c.l.b16 %v234
      %v327 = vunpack.c.h.b16 %v234
      %v328 = vunpack.c.l.b16 %v235
      %v329 = vunpack.c.h.b16 %v235
      %v330 = vunpack.c.l.b16 %v236
      %v331 = vunpack.c.h.b16 %v236
      %v332 = vunpack.c.l.b16 %v237
      %v333 = vunpack.c.h.b16 %v237
      %v334 = vunpack.c.l.b16 %v238
      %v335 = vunpack.c.h.b16 %v238
      %v336 = vunpack.c.l.b16 %v239
      %v337 = vunpack.c.h.b16 %v239
      %v338 = vunpack.c.l.b16 %v240
      %v339 = vunpack.c.h.b16 %v240
      %v340 = vunpack.c.l.b16 %v241
      %v341 = vunpack.c.h.b16 %v241
      %v342 = vunpack.c.l.b16 %v242
      %v343 = vunpack.c.h.b16 %v242
      %v344 = vunpack.c.l.b16 %v243
      %v345 = vunpack.c.h.b16 %v243
      %v346 = vunpack.c.l.b16 %v244
      %v347 = vunpack.c.h.b16 %v244
      %v348 = vunpack.c.l.b16 %v245
      %v349 = vunpack.c.h.b16 %v245
      %v350 = vunpack.c.l.b16 %v246
      %v351 = vunpack.c.h.b16 %v246
      %v352 = vunpack.c.l.b16 %v247
      %v353 = vunpack.c.h.b16 %v247
      %v354 = vunpack.c.l.b16 %v248
      %v355 = vunpack.c.h.b16 %v248
      %v356 = vunpack.c.l.b16 %v249
      %v357 = vunpack.c.h.b16 %v249
      %v358 = vunpack.c.l.b16 %v250
      %v359 = vunpack.c.h.b16 %v250
      %v360 = vunpack.c.l.b16 %v251
      %v361 = vunpack.c.h.b16 %v251
      %v362 = vunpack.c.l.b16 %v252
      %v363 = vunpack.c.h.b16 %v252
      %v364 = vunpack.c.l.b16 %v253
      %v365 = vunpack.c.h.b16 %v253
      %v366 = vunpack.c.l.b16 %v254
      %v367 = vunpack.c.h.b16 %v254
      %v368 = vunpack.c.l.b16 %v255
      %v369 = vunpack.c.h.b16 %v255
      %v370 = vunpack.c.l.b16 %v256
      %v371 = vunpack.c.h.b16 %v256
      %v372 = vunpack.c.l.b16 %v257
      %v373 = vunpack.c.h.b16 %v257
      %v374 = vunpack.c.l.b16 %v258
      %v375 = vunpack.c.h.b16 %v258
      %v376 = vunpack.c.l.b16 %v259
      %v377 = vunpack.c.h.b16 %v259
      %v378 = vunpack.c.l.b16 %v260
      %v379 = vunpack.c.h.b16 %v260
      %v380 = vpack.c.b16 %v318, %v316
      %v381 = vpack.c.b16 %v319, %v317
      %v382 = vpack.c.b16 %v322, %v320
      %v383 = vpack.c.b16 %v323, %v321
      %v384 = vpack.c.b16 %v326, %v324
      %v385 = vpack.c.b16 %v327, %v325
      %v386 = vpack.c.b16 %v330, %v328
      %v387 = vpack.c.b16 %v331, %v329
      %v388 = vpack.c.b16 %v334, %v332
      %v389 = vpack.c.b16 %v335, %v333
      %v390 = vpack.c.b16 %v338, %v336
      %v391 = vpack.c.b16 %v339, %v337
      %v392 = vpack.c.b16 %v342, %v340
      %v393 = vpack.c.b16 %v343, %v341
      %v394 = vpack.c.b16 %v346, %v344
      %v395 = vpack.c.b16 %v347, %v345
      %v396 = vpack.c.b16 %v350, %v348
      %v397 = vpack.c.b16 %v351, %v349
      %v398 = vpack.c.b16 %v354, %v352
      %v399 = vpack.c.b16 %v355, %v353
      %v400 = vpack.c.b16 %v358, %v356
      %v401 = vpack.c.b16 %v359, %v357
      %v402 = vpack.c.b16 %v362, %v360
      %v403 = vpack.c.b16 %v363, %v361
      %v404 = vpack.c.b16 %v366, %v364
      %v405 = vpack.c.b16 %v367, %v365
      %v406 = vpack.c.b16 %v370, %v368
      %v407 = vpack.c.b16 %v371, %v369
      %v408 = vpack.c.b16 %v374, %v372
      %v409 = vpack.c.b16 %v375, %v373
      %v410 = vpack.c.b16 %v378, %v376
      %v411 = vpack.c.b16 %v379, %v377
      %v447 = vunpack.c.l.b16 %v261
      %v448 = vunpack.c.l.b16 %v262
      %v449 = vunpack.c.l.b16 %v263
      %v450 = vunpack.c.l.b16 %v264
      %v451 = vunpack.c.l.b16 %v265
      %v452 = vunpack.c.l.b16 %v266
      %v453 = vunpack.c.l.b16 %v267
      %v454 = vunpack.c.l.b16 %v268
      %v455 = vunpack.c.l.b16 %v269
      %v456 = vunpack.c.l.b16 %v270
      %v457 = vunpack.c.l.b16 %v271
      %v458 = vunpack.c.l.b16 %v272
      %v459 = vunpack.c.l.b16 %v273
      %v460 = vunpack.c.l.b16 %v274
      %v461 = vunpack.c.l.b16 %v275
      %v462 = vunpack.c.l.b16 %v276
      %v463 = vunpack.c.l.b16 %v277
      %v464 = vunpack.c.l.b16 %v278
      %v465 = vunpack.c.l.b16 %v279
      %v466 = vpack.c.b16 %v448, %v447
      %v467 = vpack.c.b16 %v450, %v449
      %v468 = vpack.c.b16 %v452, %v451
      %v469 = vpack.c.b16 %v454, %v453
      %v470 = vpack.c.b16 %v456, %v455
      %v471 = vpack.c.b16 %v458, %v457
      %v472 = vpack.c.b16 %v460, %v459
      %v473 = vpack.c.b16 %v462, %v461
      %v474 = vpack.c.b16 %v464, %v463
      %v475 = vpack.c.b16 %v465, %v465
      %vm485 = vcmask 154624
      %v487 = vsel %vm485, %v381, 0
      %v490 = vsel %vm485, %v383, 0
      %v493 = vsel %vm485, %v385, 0
      %v496 = vsel %vm485, %v387, 0
      %v499 = vsel %vm485, %v389, 0
      %v502 = vsel %vm485, %v391, 0
      %v505 = vsel %vm485, %v393, 0
      %v508 = vsel %vm485, %v395, 0
      %v511 = vsel %vm485, %v397, 0
      %v514 = vsel %vm485, %v399, 0
      %v517 = vsel %vm485, %v401, 0
      %v520 = vsel %vm485, %v403, 0
      %v523 = vsel %vm485, %v405, 0
      %v526 = vsel %vm485, %v407, 0
      %v529 = vsel %vm485, %v409, 0
      %v532 = vsel %vm485, %v411, 0
      %vm534 = vcmask 1040384
      %vm535 = vcmask 1041408
      %v536 = vsel %vm534, 4294967295, 65535
      %v537 = vsel %vm535, %v536, 0
      %v539 = vand.u32 %v475, %v537
      %541 = vmatpush.bf16.msra.mxu0 %v473
      %542 = vmatpush.bf16.msra.mxu0 %v472
      %543 = vmatpush.bf16.msra.mxu0 %v471
      %544 = vmatpush.bf16.msra.mxu0 %v470
      %545 = vmatpush.bf16.msra.mxu0 %v469
      %546 = vmatpush.bf16.msra.mxu0 %v468
      %547 = vmatpush.bf16.msra.mxu0 %v467
      %548 = vmatpush.bf16.msra.mxu0 %v466
      %549 = vmatmul.bf16.gmra.mxu0 %v380
      %v550 = vpop.f32.mrf.mxu0
      %v551 = vadd.f32 %v282, %v550
      %v552 = vpop.f32.mrf.mxu0
      %v553 = vadd.f32 %v282, %v552
      %554 = vmatmul.bf16.gmra.mxu0 %v382
      %v555 = vpop.f32.mrf.mxu0
      %v556 = vadd.f32 %v282, %v555
      %v557 = vpop.f32.mrf.mxu0
      %v558 = vadd.f32 %v282, %v557
      %559 = vmatmul.bf16.gmra.mxu0 %v384
      %v560 = vpop.f32.mrf.mxu0
      %v561 = vadd.f32 %v282, %v560
      %v562 = vpop.f32.mrf.mxu0
      %v563 = vadd.f32 %v282, %v562
      %564 = vmatmul.bf16.gmra.mxu0 %v386
      %v565 = vpop.f32.mrf.mxu0
      %v566 = vadd.f32 %v282, %v565
      %v567 = vpop.f32.mrf.mxu0
      %v568 = vadd.f32 %v282, %v567
      %569 = vmatmul.bf16.gmra.mxu0 %v388
      %v570 = vpop.f32.mrf.mxu0
      %v571 = vadd.f32 %v282, %v570
      %v572 = vpop.f32.mrf.mxu0
      %v573 = vadd.f32 %v282, %v572
      %574 = vmatmul.bf16.gmra.mxu0 %v390
      %v575 = vpop.f32.mrf.mxu0
      %v576 = vadd.f32 %v282, %v575
      %v577 = vpop.f32.mrf.mxu0
      %v578 = vadd.f32 %v282, %v577
      %579 = vmatmul.bf16.gmra.mxu0 %v392
      %v580 = vpop.f32.mrf.mxu0
      %v581 = vadd.f32 %v282, %v580
      %v582 = vpop.f32.mrf.mxu0
      %v583 = vadd.f32 %v282, %v582
      %584 = vmatmul.bf16.gmra.mxu0 %v394
      %v585 = vpop.f32.mrf.mxu0
      %v586 = vadd.f32 %v282, %v585
      %v587 = vpop.f32.mrf.mxu0
      %v588 = vadd.f32 %v282, %v587
      %589 = vmatmul.bf16.gmra.mxu0 %v396
      %v590 = vpop.f32.mrf.mxu0
      %v591 = vadd.f32 %v282, %v590
      %v592 = vpop.f32.mrf.mxu0
      %v593 = vadd.f32 %v282, %v592
      %594 = vmatmul.bf16.gmra.mxu0 %v398
      %v595 = vpop.f32.mrf.mxu0
      %v596 = vadd.f32 %v282, %v595
      %v597 = vpop.f32.mrf.mxu0
      %v598 = vadd.f32 %v282, %v597
      %599 = vmatmul.bf16.gmra.mxu0 %v400
      %v600 = vpop.f32.mrf.mxu0
      %v601 = vadd.f32 %v282, %v600
      %v602 = vpop.f32.mrf.mxu0
      %v603 = vadd.f32 %v282, %v602
      %604 = vmatmul.bf16.gmra.mxu0 %v402
      %v605 = vpop.f32.mrf.mxu0
      %v606 = vadd.f32 %v282, %v605
      %v607 = vpop.f32.mrf.mxu0
      %v608 = vadd.f32 %v282, %v607
      %609 = vmatmul.bf16.gmra.mxu0 %v404
      %v610 = vpop.f32.mrf.mxu0
      %v611 = vadd.f32 %v282, %v610
      %v612 = vpop.f32.mrf.mxu0
      %v613 = vadd.f32 %v282, %v612
      %614 = vmatmul.bf16.gmra.mxu0 %v406
      %v615 = vpop.f32.mrf.mxu0
      %v616 = vadd.f32 %v282, %v615
      %v617 = vpop.f32.mrf.mxu0
      %v618 = vadd.f32 %v282, %v617
      %619 = vmatmul.bf16.gmra.mxu0 %v408
      %v620 = vpop.f32.mrf.mxu0
      %v621 = vadd.f32 %v282, %v620
      %v622 = vpop.f32.mrf.mxu0
      %v623 = vadd.f32 %v282, %v622
      %624 = vmatmul.bf16.gmra.mxu0 %v410
      %v625 = vpop.f32.mrf.mxu0
      %v626 = vadd.f32 %v282, %v625
      %v627 = vpop.f32.mrf.mxu0
      %v628 = vadd.f32 %v282, %v627
      %629 = vdwg.mxu0
      %630 = vmatpush.bf16.msra.mxu0 0
      %631 = vmatpush.bf16.msra.mxu0 0
      %632 = vmatpush.bf16.msra.mxu0 0
      %633 = vmatpush.bf16.msra.mxu0 0
      %634 = vmatpush.bf16.msra.mxu0 0
      %635 = vmatpush.bf16.msra.mxu0 0
      %636 = vmatpush.bf16.msra.mxu0 %v539
      %637 = vmatpush.bf16.msra.mxu0 %v474
      %638 = vmatmul.bf16.gmra.mxu0 %v487
      %v639 = vpop.f32.mrf.mxu0
      %v640 = vadd.f32 %v551, %v639
      %v641 = vpop.f32.mrf.mxu0
      %v642 = vadd.f32 %v553, %v641
      %643 = vmatmul.bf16.gmra.mxu0 %v490
      %v644 = vpop.f32.mrf.mxu0
      %v645 = vadd.f32 %v556, %v644
      %v646 = vpop.f32.mrf.mxu0
      %v647 = vadd.f32 %v558, %v646
      %648 = vmatmul.bf16.gmra.mxu0 %v493
      %v649 = vpop.f32.mrf.mxu0
      %v650 = vadd.f32 %v561, %v649
      %v651 = vpop.f32.mrf.mxu0
      %v652 = vadd.f32 %v563, %v651
      %653 = vmatmul.bf16.gmra.mxu0 %v496
      %v654 = vpop.f32.mrf.mxu0
      %v655 = vadd.f32 %v566, %v654
      %v656 = vpop.f32.mrf.mxu0
      %v657 = vadd.f32 %v568, %v656
      %658 = vmatmul.bf16.gmra.mxu0 %v499
      %v659 = vpop.f32.mrf.mxu0
      %v660 = vadd.f32 %v571, %v659
      %v661 = vpop.f32.mrf.mxu0
      %v662 = vadd.f32 %v573, %v661
      %663 = vmatmul.bf16.gmra.mxu0 %v502
      %v664 = vpop.f32.mrf.mxu0
      %v665 = vadd.f32 %v576, %v664
      %v666 = vpop.f32.mrf.mxu0
      %v667 = vadd.f32 %v578, %v666
      %668 = vmatmul.bf16.gmra.mxu0 %v505
      %v669 = vpop.f32.mrf.mxu0
      %v670 = vadd.f32 %v581, %v669
      %v671 = vpop.f32.mrf.mxu0
      %v672 = vadd.f32 %v583, %v671
      %673 = vmatmul.bf16.gmra.mxu0 %v508
      %v674 = vpop.f32.mrf.mxu0
      %v675 = vadd.f32 %v586, %v674
      %v676 = vpop.f32.mrf.mxu0
      %v677 = vadd.f32 %v588, %v676
      %678 = vmatmul.bf16.gmra.mxu0 %v511
      %v679 = vpop.f32.mrf.mxu0
      %v680 = vadd.f32 %v591, %v679
      %v681 = vpop.f32.mrf.mxu0
      %v682 = vadd.f32 %v593, %v681
      %683 = vmatmul.bf16.gmra.mxu0 %v514
      %v684 = vpop.f32.mrf.mxu0
      %v685 = vadd.f32 %v596, %v684
      %v686 = vpop.f32.mrf.mxu0
      %v687 = vadd.f32 %v598, %v686
      %688 = vmatmul.bf16.gmra.mxu0 %v517
      %v689 = vpop.f32.mrf.mxu0
      %v690 = vadd.f32 %v601, %v689
      %v691 = vpop.f32.mrf.mxu0
      %v692 = vadd.f32 %v603, %v691
      %693 = vmatmul.bf16.gmra.mxu0 %v520
      %v694 = vpop.f32.mrf.mxu0
      %v695 = vadd.f32 %v606, %v694
      %v696 = vpop.f32.mrf.mxu0
      %v697 = vadd.f32 %v608, %v696
      %698 = vmatmul.bf16.gmra.mxu0 %v523
      %v699 = vpop.f32.mrf.mxu0
      %v700 = vadd.f32 %v611, %v699
      %v701 = vpop.f32.mrf.mxu0
      %v702 = vadd.f32 %v613, %v701
      %703 = vmatmul.bf16.gmra.mxu0 %v526
      %v704 = vpop.f32.mrf.mxu0
      %v705 = vadd.f32 %v616, %v704
      %v706 = vpop.f32.mrf.mxu0
      %v707 = vadd.f32 %v618, %v706
      %708 = vmatmul.bf16.gmra.mxu0 %v529
      %v709 = vpop.f32.mrf.mxu0
      %v710 = vadd.f32 %v621, %v709
      %v711 = vpop.f32.mrf.mxu0
      %v712 = vadd.f32 %v623, %v711
      %713 = vmatmul.bf16.gmra.mxu0 %v532
      %v714 = vpop.f32.mrf.mxu0
      %v715 = vadd.f32 %v626, %v714
      %v716 = vpop.f32.mrf.mxu0
      %v717 = vadd.f32 %v628, %v716
      %718 = vdwg.mxu0
      %v719 = vmax.f32 %v640, 0.0
      %v720 = vmax.f32 %v642, 0.0
      %v721 = vmax.f32 %v645, 0.0
      %v722 = vmax.f32 %v647, 0.0
      %v723 = vmax.f32 %v650, 0.0
      %v724 = vmax.f32 %v652, 0.0
      %v725 = vmax.f32 %v655, 0.0
      %v726 = vmax.f32 %v657, 0.0
      %v727 = vmax.f32 %v660, 0.0
      %v728 = vmax.f32 %v662, 0.0
      %v729 = vmax.f32 %v665, 0.0
      %v730 = vmax.f32 %v667, 0.0
      %v731 = vmax.f32 %v670, 0.0
      %v732 = vmax.f32 %v672, 0.0
      %v733 = vmax.f32 %v675, 0.0
      %v734 = vmax.f32 %v677, 0.0
      %v735 = vmax.f32 %v680, 0.0
      %v736 = vmax.f32 %v682, 0.0
      %v737 = vmax.f32 %v685, 0.0
      %v738 = vmax.f32 %v687, 0.0
      %v739 = vmax.f32 %v690, 0.0
      %v740 = vmax.f32 %v692, 0.0
      %v741 = vmax.f32 %v695, 0.0
      %v742 = vmax.f32 %v697, 0.0
      %v743 = vmax.f32 %v700, 0.0
      %v744 = vmax.f32 %v702, 0.0
      %v745 = vmax.f32 %v705, 0.0
      %v746 = vmax.f32 %v707, 0.0
      %v747 = vmax.f32 %v710, 0.0
      %v748 = vmax.f32 %v712, 0.0
      %v749 = vmax.f32 %v715, 0.0
      %v750 = vmax.f32 %v717, 0.0
      %v751 = vpack.c.bf16 %v719, %v719
      %v752 = vpack.c.bf16 %v720, %v720
      %v753 = vpack.c.bf16 %v721, %v721
      %v754 = vpack.c.bf16 %v722, %v722
      %v755 = vpack.c.bf16 %v723, %v723
      %v756 = vpack.c.bf16 %v724, %v724
      %v757 = vpack.c.bf16 %v725, %v725
      %v758 = vpack.c.bf16 %v726, %v726
      %v759 = vpack.c.bf16 %v727, %v727
      %v760 = vpack.c.bf16 %v728, %v728
      %v761 = vpack.c.bf16 %v729, %v729
      %v762 = vpack.c.bf16 %v730, %v730
      %v763 = vpack.c.bf16 %v731, %v731
      %v764 = vpack.c.bf16 %v732, %v732
      %v765 = vpack.c.bf16 %v733, %v733
      %v766 = vpack.c.bf16 %v734, %v734
      %v767 = vpack.c.bf16 %v735, %v735
      %v768 = vpack.c.bf16 %v736, %v736
      %v769 = vpack.c.bf16 %v737, %v737
      %v770 = vpack.c.bf16 %v738, %v738
      %v771 = vpack.c.bf16 %v739, %v739
      %v772 = vpack.c.bf16 %v740, %v740
      %v773 = vpack.c.bf16 %v741, %v741
      %v774 = vpack.c.bf16 %v742, %v742
      %v775 = vpack.c.bf16 %v743, %v743
      %v776 = vpack.c.bf16 %v744, %v744
      %v777 = vpack.c.bf16 %v745, %v745
      %v778 = vpack.c.bf16 %v746, %v746
      %v779 = vpack.c.bf16 %v747, %v747
      %v780 = vpack.c.bf16 %v748, %v748
      %v781 = vpack.c.bf16 %v749, %v749
      %v782 = vpack.c.bf16 %v750, %v750
      %vm783 = vcmask 519168
      %784 = vst.msk [vmem:[%s226] sm:$0xf] %vm783, %v751
      %785 = vst.msk [vmem:[%s226 + $0x4] sm:$0xf] %vm783, %v752
      %786 = vst.msk [vmem:[%s226 + $0x8] sm:$0xf] %vm783, %v753
      %787 = vst.msk [vmem:[%s226 + $0xc] sm:$0xf] %vm783, %v754
      %788 = vst.msk [vmem:[%s226 + $0x10] sm:$0xf] %vm783, %v755
      %789 = vst.msk [vmem:[%s226 + $0x14] sm:$0xf] %vm783, %v756
      %790 = vst.msk [vmem:[%s226 + $0x18] sm:$0xf] %vm783, %v757
      %791 = vst.msk [vmem:[%s226 + $0x1c] sm:$0xf] %vm783, %v758
      %792 = vst.msk [vmem:[%s226 + $0x20] sm:$0xf] %vm783, %v759
      %793 = vst.msk [vmem:[%s226 + $0x24] sm:$0xf] %vm783, %v760
      %794 = vst.msk [vmem:[%s226 + $0x28] sm:$0xf] %vm783, %v761
      %795 = vst.msk [vmem:[%s226 + $0x2c] sm:$0xf] %vm783, %v762
      %796 = vst.msk [vmem:[%s226 + $0x30] sm:$0xf] %vm783, %v763
      %797 = vst.msk [vmem:[%s226 + $0x34] sm:$0xf] %vm783, %v764
      %798 = vst.msk [vmem:[%s226 + $0x38] sm:$0xf] %vm783, %v765
      %799 = vst.msk [vmem:[%s226 + $0x3c] sm:$0xf] %vm783, %v766
      %800 = vst.msk [vmem:[%s226 + $0x40] sm:$0xf] %vm783, %v767
      %801 = vst.msk [vmem:[%s226 + $0x44] sm:$0xf] %vm783, %v768
      %802 = vst.msk [vmem:[%s226 + $0x48] sm:$0xf] %vm783, %v769
      %803 = vst.msk [vmem:[%s226 + $0x4c] sm:$0xf] %vm783, %v770
      %804 = vst.msk [vmem:[%s226 + $0x50] sm:$0xf] %vm783, %v771
      %805 = vst.msk [vmem:[%s226 + $0x54] sm:$0xf] %vm783, %v772
      %806 = vst.msk [vmem:[%s226 + $0x58] sm:$0xf] %vm783, %v773
      %807 = vst.msk [vmem:[%s226 + $0x5c] sm:$0xf] %vm783, %v774
      %808 = vst.msk [vmem:[%s226 + $0x60] sm:$0xf] %vm783, %v775
      %809 = vst.msk [vmem:[%s226 + $0x64] sm:$0xf] %vm783, %v776
      %810 = vst.msk [vmem:[%s226 + $0x68] sm:$0xf] %vm783, %v777
      %811 = vst.msk [vmem:[%s226 + $0x6c] sm:$0xf] %vm783, %v778
      %812 = vst.msk [vmem:[%s226 + $0x70] sm:$0xf] %vm783, %v779
      %813 = vst.msk [vmem:[%s226 + $0x74] sm:$0xf] %vm783, %v780
      %814 = vst.msk [vmem:[%s226 + $0x78] sm:$0xf] %vm783, %v781
      %815 = vst.msk [vmem:[%s226 + $0x7c] sm:$0xf] %vm783, %v782
      %s816 = smul.u32 32, %s18
      %p817 = scmp.lt.s32.totalorder %s816, 63
      %s818 = scalar_select %p817, %s816, 63
      %p819 = scmp.lt.s32.totalorder %s19, 0
      %s820 = scalar_select %p819, %s19, 0
      %s821 = sadd.s32 %s820, %s818
      %s822 = smul.addr %s821, 4
      %s823 = scalar_lea.vmem %s3, %s822
      // Predicated region
      $region33: #{tpu_custom_call.1} parent=31 // pred_check
        %p824 = pneg %p124
      $region34: #{tpu_custom_call.1} parent=31 // pred_check_branch
        %826 = sbr.rel (%p824) target = $region36
      $region35: #{tpu_custom_call.1} parent=31 // pred_region
        %s827 = smul.u32 32, %s18
      $region36: #{tpu_custom_call.1} parent=31 // pred_fallthru
        _
    $region32: #{tpu_custom_call.1} parent=5 // pred_fallthru
      _
    %p828 = scmp.le.s32.totalorder 2, %s9
    // Predicated region
    $region37: #{tpu_custom_call.1} parent=5 // pred_check
      %p829 = pneg %p828
    $region38: #{tpu_custom_call.1} parent=5 // pred_check_branch
      %831 = sbr.rel (%p829) target = $region40
    $region39: #{tpu_custom_call.1} parent=5 // pred_region
      %s832 = ssub.s32 %s9, 2
      // Predicated region
      $region41: #{tpu_custom_call.1} parent=39 // pred_check
        %p833 = pneg %p130
      $region42: #{tpu_custom_call.1} parent=39 // pred_check_branch
        %835 = sbr.rel (%p833) target = $region44
      $region43: #{tpu_custom_call.1} parent=39 // pred_region
        %s836 = smul.u32 32, %s20
        %p837 = scmp.lt.s32.totalorder %s836, 63
        %s838 = scalar_select %p837, %s836, 63
        %p839 = scmp.lt.s32.totalorder %s21, 0
        %s840 = scalar_select %p839, %s21, 0
        %s841 = sadd.s32 %s840, %s838
        %s842 = smul.addr %s841, 4
        %s843 = scalar_lea.vmem %s3, %s842
      $region44: #{tpu_custom_call.1} parent=39 // pred_fallthru
        _
    $region40: #{tpu_custom_call.1} parent=5 // pred_fallthru
      _
  $region6: #{tpu_custom_call.1} parent=0 // loop_footer
    %s13 = sadd.s32 1, %s9
  $region7: #{tpu_custom_call.1} parent=0 // loop_footer_branch
    %8 = sbr.rel target = $region3
  $region8: #{tpu_custom_call.1} parent=0 // loop_exit
    _

</llo_original>
